<compile_context>
chip_gen: v6e
topology: v6e:2x2x1
jax: 0.10.0
libtpu: 0.0.40
codegen_flags: <defaults>
</compile_context>

<pallas_src>
import jax
import jax.numpy as jnp
from jax.experimental import pallas as pl
from jax.experimental.pallas import tpu as pltpu


def _round_up(x, m):
    return (x + m - 1) // m * m


# ---------------------------------------------------------------------------
# Pallas kernel: one (TB, 192) @ (192, Hp) matmul + folded scalar heads + bias.
# ---------------------------------------------------------------------------
def _encoder_kernel(
    x_ref,      # (TB, 192)  concat([instrument_emb, style_emb]) activation tile
    tpd_ref,    # (TB, 3)    [tempo, pitch, duration] packed scalars
    w_ref,      # (192, Hp)  projection weight rows 0:192 (instrument+style), pre-T
    fold_ref,   # (8, Hp)    rows 0..2 = folded tempo/pitch/duration vectors
    bias_ref,   # (1, Hp)    projection bias + folded scalar-head biases
    out_ref,    # (TB, Hp)
):
    # Single K=192 MXU matmul (replaces 5 narrow-K partial matmuls).
    acc = jnp.dot(x_ref[...], w_ref[...], preferred_element_type=jnp.float32)

    # Folded Linear(1,64)->projection heads: pure VPU broadcast mul/add.
    tpd = tpd_ref[...]
    acc += tpd[:, 0:1] * fold_ref[0:1, :]
    acc += tpd[:, 1:2] * fold_ref[1:2, :]
    acc += tpd[:, 2:3] * fold_ref[2:3, :]

    out_ref[...] = (acc + bias_ref[...]).astype(out_ref.dtype)


# ---------------------------------------------------------------------------
# One-time parameter preparation (NOT on the per-call path).
# ---------------------------------------------------------------------------
def prepare_encoder_params(params):
    H = params["projection_b"].shape[0]
    Hp = _round_up(H, 128)

    W = params["projection_w"].T.astype(jnp.float32)   # (384, H)
    Wi = W[0:64]       # instrument slice
    Ws = W[64:192]     # style slice
    Wt = W[192:256]    # tempo slice
    Wp = W[256:320]    # pitch slice
    Wd = W[320:384]    # duration slice

    # Fold the scalar heads through the final projection.
    fold_t = params["tempo_w"].T.astype(jnp.float32) @ Wt        # (1, H)
    fold_p = params["pitch_w"].T.astype(jnp.float32) @ Wp        # (1, H)
    fold_d = params["duration_w"].T.astype(jnp.float32) @ Wd     # (1, H)
    fold = jnp.concatenate([fold_t, fold_p, fold_d], axis=0)     # (3, H)
    fold = jnp.pad(fold, ((0, 8 - 3), (0, 0)))                   # (8, H) sublane-aligned

    bias = (params["projection_b"][None, :].astype(jnp.float32)
            + params["tempo_b"][None, :].astype(jnp.float32) @ Wt
            + params["pitch_b"][None, :].astype(jnp.float32) @ Wp
            + params["duration_b"][None, :].astype(jnp.float32) @ Wd)   # (1, H)

    W_is = jnp.concatenate([Wi, Ws], axis=0)                     # (192, H)

    # Pad hidden axis to a multiple of 128 for lane-dense stores.
    pad = Hp - H
    if pad:
        W_is = jnp.pad(W_is, ((0, 0), (0, pad)))
        fold = jnp.pad(fold, ((0, 0), (0, pad)))
        bias = jnp.pad(bias, ((0, 0), (0, pad)))

    return {
        "instrument_embedding": params["instrument_embedding"].astype(jnp.float32),
        "style_embedding": params["style_embedding"].astype(jnp.float32),
        "W_is": W_is,
        "fold_tpd": fold,
        "bias": bias,
        "hidden_size": H,
    }


# ---------------------------------------------------------------------------
# Forward pass wrapper.
# ---------------------------------------------------------------------------
def musical_attributes_encoder(prep, attributes, *, tile_b=512):
    instruments = attributes["instruments"]   # int32 (B,) or (B, N)
    style       = attributes["style"]         # int32 (B,)

    # Embedding lookups (data-dependent gathers) - plain JAX glue.
    inst_emb = jnp.take(prep["instrument_embedding"], instruments, axis=0)
    if inst_emb.ndim > 2:
        inst_emb = inst_emb.sum(axis=1)                         # (B, 64)
    style_emb = jnp.take(prep["style_embedding"], style, axis=0)  # (B, 128)

    x = jnp.concatenate([inst_emb, style_emb], axis=1).astype(jnp.float32)   # (B, 192)
    tpd = jnp.concatenate(
        [attributes["tempo"], attributes["pitch"], attributes["duration"]],
        axis=1).astype(jnp.float32)                                          # (B, 3)

    B, K = x.shape
    H = prep["hidden_size"]
    Hp = prep["W_is"].shape[1]

    # Batch tiling: tile rounded to sublane multiple; pad B to a tile multiple.
    tb = min(tile_b, _round_up(B, 8))
    b_pad = _round_up(B, tb)
    if b_pad != B:
        x = jnp.pad(x, ((0, b_pad - B), (0, 0)))
        tpd = jnp.pad(tpd, ((0, b_pad - B), (0, 0)))

    out = pl.pallas_call(
        _encoder_kernel,
        out_shape=jax.ShapeDtypeStruct((b_pad, Hp), jnp.float32),
        grid_spec=pltpu.PrefetchScalarGridSpec(
            num_scalar_prefetch=0,
            grid=(b_pad // tb,),
            in_specs=[
                pl.BlockSpec((tb, K),  lambda i: (i, 0)),   # activations: tiled over batch
                pl.BlockSpec((tb, 3),  lambda i: (i, 0)),   # packed scalars: tiled over batch
                pl.BlockSpec((K, Hp),  lambda i: (0, 0)),   # weight: VMEM-resident
                pl.BlockSpec((8, Hp),  lambda i: (0, 0)),   # folded scalar-head vectors
                pl.BlockSpec((1, Hp),  lambda i: (0, 0)),   # folded bias
            ],
            out_specs=pl.BlockSpec((tb, Hp), lambda i: (i, 0)),
        ),
        compiler_params=pltpu.CompilerParams(
            dimension_semantics=("parallel",),
        ),
    )(x, tpd, prep["W_is"], prep["fold_tpd"], prep["bias"])

    return out[:B, :H]


# ---------------------------------------------------------------------------
# Parameter init (mirrors the nn.Module layout: Linear stores weight as (out, in)).
# ---------------------------------------------------------------------------
def init_params(key, hidden_size):
    ks = jax.random.split(key, 12)
    s = 0.02
    return {
        "instrument_embedding": s * jax.random.normal(ks[0], (100, 64), jnp.float32),
        "style_embedding":      s * jax.random.normal(ks[1], (50, 128), jnp.float32),
        "tempo_w":    s * jax.random.normal(ks[2], (64, 1), jnp.float32),
        "tempo_b":    s * jax.random.normal(ks[3], (64,), jnp.float32),
        "pitch_w":    s * jax.random.normal(ks[4], (64, 1), jnp.float32),
        "pitch_b":    s * jax.random.normal(ks[5], (64,), jnp.float32),
        "duration_w": s * jax.random.normal(ks[6], (64, 1), jnp.float32),
        "duration_b": s * jax.random.normal(ks[7], (64,), jnp.float32),
        "projection_w": s * jax.random.normal(ks[8], (hidden_size, 64 * 3 + 128 + 64), jnp.float32),
        "projection_b": s * jax.random.normal(ks[9], (hidden_size,), jnp.float32),
    }


def _reference(params, attributes):
    """Pure-JAX reference mirroring the PyTorch forward."""
    inst_emb = jnp.take(params["instrument_embedding"], attributes["instruments"], axis=0)
    if inst_emb.ndim > 2:
        inst_emb = inst_emb.sum(axis=1)
    style_emb = jnp.take(params["style_embedding"], attributes["style"], axis=0)
    tempo_emb = attributes["tempo"] @ params["tempo_w"].T + params["tempo_b"]
    pitch_emb = attributes["pitch"] @ params["pitch_w"].T + params["pitch_b"]
    dur_emb = attributes["duration"] @ params["duration_w"].T + params["duration_b"]
    combined = jnp.concatenate([inst_emb, style_emb, tempo_emb, pitch_emb, dur_emb], axis=1)
    return combined @ params["projection_w"].T + params["projection_b"]


if __name__ == "__main__":
    key = jax.random.PRNGKey(0)
    hidden_size = 32
    batch = 2
    n_instruments = 3

    params = init_params(key, hidden_size)
    prep = prepare_encoder_params(params)   # one-time algebraic folding

    k1, k2, k3, k4, k5 = jax.random.split(jax.random.PRNGKey(1), 5)
    attributes = {
        "instruments": jax.random.randint(k1, (batch, n_instruments), 0, 100, dtype=jnp.int32),
        "style":       jax.random.randint(k2, (batch,), 0, 50, dtype=jnp.int32),
        "tempo":       jax.random.uniform(k3, (batch, 1), jnp.float32, 0.5, 2.0),
        "pitch":       jax.random.uniform(k4, (batch, 1), jnp.float32, -1.0, 1.0),
        "duration":    jax.random.uniform(k5, (batch, 1), jnp.float32, 0.1, 4.0),
    }

    out = musical_attributes_encoder(prep, attributes)
    out = jax.block_until_ready(out)

    ref = _reference(params, attributes)
    assert out.shape == (batch, hidden_size), out.shape
    assert jnp.allclose(out, ref, atol=1e-5, rtol=1e-5), "mismatch vs reference"

    print("KERNEL_OK")
</pallas_src>

<mosaic_0001>
module attributes {stable_mosaic.version = 11 : i64} {
  func.func @_encoder_kernel(%arg0: i32, %arg1: memref<8x192xf32, #tpu.memory_space<vmem>>, %arg2: memref<8x3xf32, #tpu.memory_space<vmem>>, %arg3: memref<192x128xf32, #tpu.memory_space<vmem>>, %arg4: memref<8x128xf32, #tpu.memory_space<vmem>>, %arg5: memref<1x128xf32, #tpu.memory_space<vmem>>, %arg6: memref<8x128xf32, #tpu.memory_space<vmem>>) attributes {dimension_semantics = [#tpu.dimension_semantics<parallel>], iteration_bounds = array<i64: 1>, scalar_prefetch = 0 : i64, scratch_operands = 0 : i64, tpu.core_type = #tpu.core_type<tc>, window_params = [{transform_indices = @transform_0, window_bounds = array<i64: 8, 192>}, {transform_indices = @transform_1, window_bounds = array<i64: 8, 3>}, {pipeline_mode = #tpu.pipeline_mode<synchronous>, transform_indices = @transform_2, window_bounds = array<i64: 192, 128>}, {pipeline_mode = #tpu.pipeline_mode<synchronous>, transform_indices = @transform_3, window_bounds = array<i64: 8, 128>}, {pipeline_mode = #tpu.pipeline_mode<synchronous>, transform_indices = @transform_4, window_bounds = array<i64: 1, 128>}, {transform_indices = @transform_5, window_bounds = array<i64: 8, 128>}]} {
    %c0 = arith.constant 0 : index
    %c0_0 = arith.constant 0 : index
    %0 = vector.load %arg1[%c0, %c0_0] : memref<8x192xf32, #tpu.memory_space<vmem>>, vector<8x192xf32>
    %c0_1 = arith.constant 0 : index
    %c0_2 = arith.constant 0 : index
    %1 = vector.load %arg3[%c0_1, %c0_2] : memref<192x128xf32, #tpu.memory_space<vmem>>, vector<192x128xf32>
    %cst = arith.constant dense<0.000000e+00> : vector<8x128xf32>
    %2 = tpu.matmul %0, %1, %cst {dimension_numbers = #tpu.dot_dimension_numbers<[1], [0], [0], [1], [0, 0, 1, 1], [], []>} : vector<8x192xf32>, vector<192x128xf32>, vector<8x128xf32> -> vector<8x128xf32>
    %c0_3 = arith.constant 0 : index
    %c0_4 = arith.constant 0 : index
    %3 = vector.load %arg2[%c0_3, %c0_4] : memref<8x3xf32, #tpu.memory_space<vmem>>, vector<8x3xf32>
    %4 = vector.extract_strided_slice %3 {offsets = [0, 0], sizes = [8, 1], strides = [1, 1]} : vector<8x3xf32> to vector<8x1xf32>
    %c0_5 = arith.constant 0 : index
    %c0_6 = arith.constant 0 : index
    %5 = vector.load %arg4[%c0_5, %c0_6] : memref<8x128xf32, #tpu.memory_space<vmem>>, vector<1x128xf32>
    %6 = vector.broadcast %4 : vector<8x1xf32> to vector<8x128xf32>
    %7 = vector.broadcast %5 : vector<1x128xf32> to vector<8x128xf32>
    %8 = arith.mulf %6, %7 : vector<8x128xf32>
    %9 = arith.addf %2, %8 : vector<8x128xf32>
    %10 = vector.extract_strided_slice %3 {offsets = [0, 1], sizes = [8, 1], strides = [1, 1]} : vector<8x3xf32> to vector<8x1xf32>
    %c1 = arith.constant 1 : index
    %c0_7 = arith.constant 0 : index
    %11 = vector.load %arg4[%c1, %c0_7] : memref<8x128xf32, #tpu.memory_space<vmem>>, vector<1x128xf32>
    %12 = vector.broadcast %10 : vector<8x1xf32> to vector<8x128xf32>
    %13 = vector.broadcast %11 : vector<1x128xf32> to vector<8x128xf32>
    %14 = arith.mulf %12, %13 : vector<8x128xf32>
    %15 = arith.addf %9, %14 : vector<8x128xf32>
    %16 = vector.extract_strided_slice %3 {offsets = [0, 2], sizes = [8, 1], strides = [1, 1]} : vector<8x3xf32> to vector<8x1xf32>
    %c2 = arith.constant 2 : index
    %c0_8 = arith.constant 0 : index
    %17 = vector.load %arg4[%c2, %c0_8] : memref<8x128xf32, #tpu.memory_space<vmem>>, vector<1x128xf32>
    %18 = vector.broadcast %16 : vector<8x1xf32> to vector<8x128xf32>
    %19 = vector.broadcast %17 : vector<1x128xf32> to vector<8x128xf32>
    %20 = arith.mulf %18, %19 : vector<8x128xf32>
    %21 = arith.addf %15, %20 : vector<8x128xf32>
    %c0_9 = arith.constant 0 : index
    %c0_10 = arith.constant 0 : index
    %22 = vector.load %arg5[%c0_9, %c0_10] : memref<1x128xf32, #tpu.memory_space<vmem>>, vector<1x128xf32>
    %23 = vector.broadcast %22 : vector<1x128xf32> to vector<8x128xf32>
    %24 = arith.addf %21, %23 : vector<8x128xf32>
    %c0_11 = arith.constant 0 : index
    %c0_12 = arith.constant 0 : index
    %25 = vector.load %arg6[%c0_11, %c0_12] : memref<8x128xf32, #tpu.memory_space<vmem>>, vector<8x128xf32>
    tpu.vector_store %arg6[%c0_11, %c0_12], %24 {strides = array<i32>} : memref<8x128xf32, #tpu.memory_space<vmem>>, vector<8x128xf32>,
    return
  }
  func.func @transform_0(%arg0: i32) -> (i32, i32) {
    %c0_i32 = arith.constant 0 : i32
    %c0_i32_0 = arith.constant 0 : i32
    return %arg0, %c0_i32 : i32, i32
  }
  func.func @transform_1(%arg0: i32) -> (i32, i32) {
    %c0_i32 = arith.constant 0 : i32
    %c0_i32_0 = arith.constant 0 : i32
    return %arg0, %c0_i32 : i32, i32
  }
  func.func @transform_2(%arg0: i32) -> (i32, i32) {
    %c0_i32 = arith.constant 0 : i32
    %c0_i32_0 = arith.constant 0 : i32
    %c0_i32_1 = arith.constant 0 : i32
    return %c0_i32, %c0_i32_0 : i32, i32
  }
  func.func @transform_3(%arg0: i32) -> (i32, i32) {
    %c0_i32 = arith.constant 0 : i32
    %c0_i32_0 = arith.constant 0 : i32
    %c0_i32_1 = arith.constant 0 : i32
    return %c0_i32, %c0_i32_0 : i32, i32
  }
  func.func @transform_4(%arg0: i32) -> (i32, i32) {
    %c0_i32 = arith.constant 0 : i32
    %c0_i32_0 = arith.constant 0 : i32
    %c0_i32_1 = arith.constant 0 : i32
    return %c0_i32, %c0_i32_0 : i32, i32
  }
  func.func @transform_5(%arg0: i32) -> (i32, i32) {
    %c0_i32 = arith.constant 0 : i32
    %c0_i32_0 = arith.constant 0 : i32
    return %arg0, %c0_i32 : i32, i32
  }
}

</mosaic_0001>

<llo_original>
// kernel: tpu_custom_call.1
$region0: #{tpu_custom_call.1}
  #allocation0 [shape = 'u32[]', space=smem, size = 0x4, offset = 0x4, fixed_abs, tag = 'smem constant byte address 0x4 - core index']
  #allocation1 [shape = 'u32[144,128]{1,0:T(1,128)}', space=vmem, size = 0x12000, scoped, tag = 'internal scratch']
  %s0 = inlined_call_operand.hbm [shape: f32[8,192], index: 0, kind: input, shape index: {}]
  %s1 = inlined_call_operand.vmem [shape: f32[8,3], index: 1, kind: input, shape index: {}]
  %s2 = inlined_call_operand.hbm [shape: f32[192,128], index: 2, kind: input, shape index: {}]
  %s3 = inlined_call_operand.vmem [shape: f32[8,128], index: 3, kind: input, shape index: {}]
  %s4 = inlined_call_operand.vmem [shape: f32[1,128], index: 4, kind: input, shape index: {}]
  %s5 = inlined_call_operand.hbm [shape: f32[8,128], index: 5, kind: output, shape index: {}]
  %s6 = sld [smem:[#allocation0]]
  $region38: #{tpu_custom_call.1} parent=0
    _
  %s8 = ssub.s32 1, %s6
  %s9 = scalar_select 0, %s8, %s6
  $region1: #{tpu_custom_call.1} parent=0
    #allocation2 [shape = 'u8[8192]{0}', space=vmem, size = 0x2000, scoped, tag = 'input window, operand 0, single buffered']
    #allocation3 [shape = 's32[1]{0}', space=sflag, size = 0x4, scoped, tag = 'scoped memory for tpu_custom_call.1']
    #allocation4 [shape = 's32[1]{0}', space=sflag, size = 0x4, scoped, tag = 'scoped memory for tpu_custom_call.1']
    #allocation5 [shape = 'u8[98304]{0}', space=vmem, size = 0x18000, scoped, tag = 'input window, operand 2, single buffered']
    #allocation6 [shape = 's32[1]{0}', space=sflag, size = 0x4, scoped, tag = 'scoped memory for tpu_custom_call.1']
    #allocation7 [shape = 'u8[4096]{0}', space=vmem, size = 0x1000, scoped, tag = 'output window, operand 0, single buffered']
    %10 = vsyncpa [#allocation3], 0
    %11 = vsyncpa [#allocation6], 0
    %12 = vsyncpa [#allocation4], 0
    // Predicated region
    $region2: #{tpu_custom_call.1} parent=1 // pred_check
      _
    $region3: #{tpu_custom_call.1} parent=1 // pred_check_branch
      %14 = sbr.rel (0) target = $region5
    $region4: #{tpu_custom_call.1} parent=1 // pred_region
      %s16 = ssub.s32 256, 256
      %17 = vsyncadd [#allocation3], %s16
      %s19 = sshll.u32 [#allocation2], 4
      %s20 = int_to_ptr.vmem [resolvable:$true] %s19
      %22 = dma.hbm_to_vmem [thread:$0]  %s0, 256, %s20, [#allocation3]
    $region5: #{tpu_custom_call.1} parent=1 // pred_fallthru
      _
    // Predicated region
    $region6: #{tpu_custom_call.1} parent=1 // pred_check
      _
    $region7: #{tpu_custom_call.1} parent=1 // pred_check_branch
      %24 = sbr.rel (0) target = $region9
    $region8: #{tpu_custom_call.1} parent=1 // pred_region
      _
    $region9: #{tpu_custom_call.1} parent=1 // pred_fallthru
      _
    // Predicated region
    $region10: #{tpu_custom_call.1} parent=1 // pred_check
      _
    $region11: #{tpu_custom_call.1} parent=1 // pred_check_branch
      %26 = sbr.rel (0) target = $region13
    $region12: #{tpu_custom_call.1} parent=1 // pred_region
      %s28 = ssub.s32 3072, 3072
      %29 = vsyncadd [#allocation6], %s28
      %s30 = sshll.u32 [#allocation5], 4
      %s31 = int_to_ptr.vmem [resolvable:$true] %s30
      %36 = dma.hbm_to_vmem [thread:$0]  %s2, 3072, %s31, [#allocation6], 128, 128, 8
    $region13: #{tpu_custom_call.1} parent=1 // pred_fallthru
      _
    // Predicated region
    $region14: #{tpu_custom_call.1} parent=1 // pred_check
      _
    $region15: #{tpu_custom_call.1} parent=1 // pred_check_branch
      %38 = sbr.rel (0) target = $region17
    $region16: #{tpu_custom_call.1} parent=1 // pred_region
      _
    $region17: #{tpu_custom_call.1} parent=1 // pred_fallthru
      _
    // Predicated region
    $region18: #{tpu_custom_call.1} parent=1 // pred_check
      _
    $region19: #{tpu_custom_call.1} parent=1 // pred_check_branch
      %40 = sbr.rel (0) target = $region21
    $region20: #{tpu_custom_call.1} parent=1 // pred_region
      _
    $region21: #{tpu_custom_call.1} parent=1 // pred_fallthru
      _
    // Predicated region
    $region22: #{tpu_custom_call.1} parent=1 // pred_check
      _
    $region23: #{tpu_custom_call.1} parent=1 // pred_check_branch
      %42 = sbr.rel (0) target = $region25
    $region24: #{tpu_custom_call.1} parent=1 // pred_region
      %43 = dma.done [#allocation3], 256
    $region25: #{tpu_custom_call.1} parent=1 // pred_fallthru
      _
    // Predicated region
    $region26: #{tpu_custom_call.1} parent=1 // pred_check
      _
    $region27: #{tpu_custom_call.1} parent=1 // pred_check_branch
      %45 = sbr.rel (0) target = $region29
    $region28: #{tpu_custom_call.1} parent=1 // pred_region
      %46 = dma.done [#allocation6], 3072
    $region29: #{tpu_custom_call.1} parent=1 // pred_fallthru
      _
    %v47 = vld [vmem:[#allocation2] sm:$0xff]
    %v48 = vld [vmem:[#allocation2 + $0x8] sm:$0xff]
    %v49 = vld [vmem:[#allocation5] sm:$0xff]
    %v50 = vld [vmem:[#allocation5 + $0x8] sm:$0xff]
    %v51 = vld [vmem:[#allocation5 + $0x10] sm:$0xff]
    %v52 = vld [vmem:[#allocation5 + $0x18] sm:$0xff]
    %v53 = vld [vmem:[#allocation5 + $0x20] sm:$0xff]
    %v54 = vld [vmem:[#allocation5 + $0x28] sm:$0xff]
    %v55 = vld [vmem:[#allocation5 + $0x30] sm:$0xff]
    %v56 = vld [vmem:[#allocation5 + $0x38] sm:$0xff]
    %v57 = vld [vmem:[#allocation5 + $0x40] sm:$0xff]
    %v58 = vld [vmem:[#allocation5 + $0x48] sm:$0xff]
    %v59 = vld [vmem:[#allocation5 + $0x50] sm:$0xff]
    %v60 = vld [vmem:[#allocation5 + $0x58] sm:$0xff]
    %v61 = vld [vmem:[#allocation5 + $0x60] sm:$0xff]
    %v62 = vld [vmem:[#allocation5 + $0x68] sm:$0xff]
    %v63 = vld [vmem:[#allocation5 + $0x70] sm:$0xff]
    %v64 = vld [vmem:[#allocation5 + $0x78] sm:$0xff]
    %v65 = vld [vmem:[#allocation5 + $0x80] sm:$0xff]
    %v66 = vld [vmem:[#allocation5 + $0x88] sm:$0xff]
    %v67 = vld [vmem:[#allocation5 + $0x90] sm:$0xff]
    %v68 = vld [vmem:[#allocation5 + $0x98] sm:$0xff]
    %v69 = vld [vmem:[#allocation5 + $0xa0] sm:$0xff]
    %v70 = vld [vmem:[#allocation5 + $0xa8] sm:$0xff]
    %v71 = vld [vmem:[#allocation5 + $0xb0] sm:$0xff]
    %v72 = vld [vmem:[#allocation5 + $0xb8] sm:$0xff]
    %v73 = vld [vmem:[%s1] sm:$0xff]
    %v74 = vld [vmem:[%s3] sm:$0x1]
    %76 = vset.pattern.permute.xlu0 0
    %77 = vperm.xlu0 %76, %v73
    %v78 = vpop.permute.xlu0 %77
    %v80 = vlaneseq
    %v81 = vshrl.u32 %v80, 7
    %v82 = vsub.s32 0, %v81
    %v83 = vrot.slane %v74, %v82
    %v84 = vmul.f32 %v78, %v83
    %vm85 = vcmask 523264
    %v87 = vsel %vm85, %v48, 0
    %89 = vmatprep.subr.mxu0 0.0
    %90 = vmatpush1.msra.mxu0 %v64
    %91 = vmatprep.subr.mxu0 0.0
    %92 = vmatpush1.msra.mxu0 %v63
    %93 = vmatprep.subr.mxu0 0.0
    %94 = vmatpush1.msra.mxu0 %v62
    %95 = vmatprep.subr.mxu0 0.0
    %96 = vmatpush1.msra.mxu0 %v61
    %97 = vmatprep.subr.mxu0 0.0
    %98 = vmatpush1.msra.mxu0 %v60
    %99 = vmatprep.subr.mxu0 0.0
    %100 = vmatpush1.msra.mxu0 %v59
    %101 = vmatprep.subr.mxu0 0.0
    %102 = vmatpush1.msra.mxu0 %v58
    %103 = vmatprep.subr.mxu0 0.0
    %104 = vmatpush1.msra.mxu0 %v57
    %105 = vmatprep.subr.mxu0 0.0
    %106 = vmatpush1.msra.mxu0 %v56
    %107 = vmatprep.subr.mxu0 0.0
    %108 = vmatpush1.msra.mxu0 %v55
    %109 = vmatprep.subr.mxu0 0.0
    %110 = vmatpush1.msra.mxu0 %v54
    %111 = vmatprep.subr.mxu0 0.0
    %112 = vmatpush1.msra.mxu0 %v53
    %113 = vmatprep.subr.mxu0 0.0
    %114 = vmatpush1.msra.mxu0 %v52
    %115 = vmatprep.subr.mxu0 0.0
    %116 = vmatpush1.msra.mxu0 %v51
    %117 = vmatprep.subr.mxu0 0.0
    %118 = vmatpush1.msra.mxu0 %v50
    %119 = vmatprep.subr.mxu0 0.0
    %120 = vmatpush1.msra.mxu0 %v49
    %121 = vmatprep.subr.mxu0 0.0
    %122 = vmatpush2.msra.mxu0 0.0
    %123 = vmatprep.subr.mxu0 0.0
    %124 = vmatpush2.msra.mxu0 0.0
    %125 = vmatprep.subr.mxu0 0.0
    %126 = vmatpush2.msra.mxu0 0.0
    %127 = vmatprep.subr.mxu0 0.0
    %128 = vmatpush2.msra.mxu0 0.0
    %129 = vmatprep.subr.mxu0 0.0
    %130 = vmatpush2.msra.mxu0 0.0
    %131 = vmatprep.subr.mxu0 0.0
    %132 = vmatpush2.msra.mxu0 0.0
    %133 = vmatprep.subr.mxu0 0.0
    %134 = vmatpush2.msra.mxu0 0.0
    %135 = vmatprep.subr.mxu0 0.0
    %136 = vmatpush2.msra.mxu0 0.0
    %137 = vmatprep.subr.mxu0 0.0
    %138 = vmatpush2.msra.mxu0 %v72
    %139 = vmatprep.subr.mxu0 0.0
    %140 = vmatpush2.msra.mxu0 %v71
    %141 = vmatprep.subr.mxu0 0.0
    %142 = vmatpush2.msra.mxu0 %v70
    %143 = vmatprep.subr.mxu0 0.0
    %144 = vmatpush2.msra.mxu0 %v69
    %145 = vmatprep.subr.mxu0 0.0
    %146 = vmatpush2.msra.mxu0 %v68
    %147 = vmatprep.subr.mxu0 0.0
    %148 = vmatpush2.msra.mxu0 %v67
    %149 = vmatprep.subr.mxu0 0.0
    %150 = vmatpush2.msra.mxu0 %v66
    %151 = vmatprep.subr.mxu0 0.0
    %152 = vmatpush2.msra.mxu0 %v65
    %153 = vmatprep.mubr.f32.mxu0 %v87
    %154 = vmatmul.mubr.f32.gmra.mxu0 %v47
    %v155 = vpop.f32.mrf.mxu0
    %v156 = vadd.f32 %v84, %v155
    %v157 = vpop.f32.mrf.mxu0
    %158 = vdwg.mxu0
    %v159 = vld [vmem:[%s3 + $0x1] sm:$0x1]
    %160 = vset.pattern.permute.xlu0 1
    %161 = vperm.xlu0 %160, %v73
    %v162 = vpop.permute.xlu0 %161
    %v164 = vlaneseq
    %v165 = vshrl.u32 %v164, 7
    %v166 = vsub.s32 0, %v165
    %v167 = vrot.slane %v159, %v166
    %v168 = vmul.f32 %v162, %v167
    %v169 = vadd.f32 %v156, %v168
    %v170 = vld [vmem:[%s3 + $0x2] sm:$0x1]
    %171 = vset.pattern.permute.xlu0 2
    %172 = vperm.xlu0 %171, %v73
    %v173 = vpop.permute.xlu0 %172
    %v175 = vlaneseq
    %v176 = vshrl.u32 %v175, 7
    %v177 = vsub.s32 0, %v176
    %v178 = vrot.slane %v170, %v177
    %v179 = vmul.f32 %v173, %v178
    %v180 = vadd.f32 %v169, %v179
    %v181 = vld [vmem:[%s4] sm:$0x1]
    %v183 = vlaneseq
    %v184 = vshrl.u32 %v183, 7
    %v185 = vsub.s32 0, %v184
    %v186 = vrot.slane %v181, %v185
    %v188 = vadd.f32 %v180, %v186
    %189 = vst [vmem:[#allocation7] sm:$0xff] %v188
    // Predicated region
    $region30: #{tpu_custom_call.1} parent=1 // pred_check
      _
    $region31: #{tpu_custom_call.1} parent=1 // pred_check_branch
      %191 = sbr.rel (0) target = $region33
    $region32: #{tpu_custom_call.1} parent=1 // pred_region
      %s193 = ssub.s32 128, 128
      %194 = vsyncadd [#allocation4], %s193
      %s196 = sshll.u32 [#allocation7], 4
      %s197 = int_to_ptr.vmem [resolvable:$true] %s196
      %199 = dma.vmem_to_hbm [thread:$0]  %s197, 128, %s5, [#allocation4]
    $region33: #{tpu_custom_call.1} parent=1 // pred_fallthru
      _
    // Predicated region
    $region34: #{tpu_custom_call.1} parent=1 // pred_check
      _
    $region35: #{tpu_custom_call.1} parent=1 // pred_check_branch
      %201 = sbr.rel (0) target = $region37
    $region36: #{tpu_custom_call.1} parent=1 // pred_region
      %202 = dma.done [#allocation4], 128
    $region37: #{tpu_custom_call.1} parent=1 // pred_fallthru
      _
    %203 = vsyncpa [#allocation3], 1
    %204 = vsyncpa [#allocation6], 1
    %205 = vsyncpa [#allocation4], 1

</llo_original>
